<compile_context>
chip_gen: v5e
topology: v5e:2x2
jax: 0.10.0
libtpu: 0.0.40
codegen_flags: <defaults>
</compile_context>

<pallas_src>
import functools
import math

import jax
import jax.numpy as jnp
import numpy as np
from jax import lax
from jax.experimental import pallas as pl
from jax.experimental.pallas import tpu as pltpu


_LN10_SQ = math.log(10.0) ** 2


def _round_up(x, m):
    return ((x + m - 1) // m) * m


def _pick_time_tile(L, log_opt):
    """Rows of the [TL, NB] tile streamed per grid step."""
    tl = 1024
    try:
        # v7x (64 MiB VMEM / ~3.2 TB/s HBM): bigger steps amortize the
        # ~0.35 us per-step pipeline overhead.  Keep 1024 when the log branch
        # is on (extra full-tile temporaries need VMEM headroom).
        cap = getattr(pltpu.get_tpu_info(), "vmem_capacity_bytes", None)
        if cap is not None and cap <= 64 * 1024 * 1024 and not log_opt:
            tl = 2048
    except Exception:
        pass
    return min(tl, L)


def _pick_station_block(N):
    """Lane block: >= 2 blocks when possible so megacore can split stations."""
    if N <= 128:
        return N
    return min(512, _round_up((N + 1) // 2, 128))


def _nse_kernel(yt_ref, yp_ref, *rest,
                tl, tl_last, nb, nb_last, nl, nn, rem, spin_base, align,
                l_eff, eps, eps_log, log_opt, ragged, manual):
    """One (TL, NB) time tile of the NSE accumulation for one station block."""
    j = pl.program_id(0)          # station block ("parallel")
    i = pl.program_id(1)          # time tile     ("arbitrary", reduction)

    n_out = 3 if log_opt else 2
    outs, scratch = rest[:n_out], rest[n_out:]
    nse_out, valid_out = outs[0], outs[1]
    nsel_out = outs[2] if log_opt else None
    n_acc = 8 if log_opt else 4
    accs = scratch[:n_acc]
    cnt, mean, m2, num = accs[:4]
    if log_opt:
        lcnt, lmean, lm2, lnum = accs[4:8]
    if manual:
        buf, sem = scratch[n_acc], scratch[n_acc + 1]

    one = jnp.float32(1.0)
    zero = jnp.float32(0.0)

    # ------------------------------------------------------------------ DMA
    if manual:
        # y_true stays in HBM; fetch the spin_up-shifted [rows, cols] window
        # manually.  Row offsets are multiples of `align` (dtype sublane
        # packing); the sub-`align` remainder is absorbed by a static shift
        # inside VMEM.  Shapes differ for the last time tile / last station
        # block, so start/wait are dispatched over the static combinations.
        slot = lax.rem(i, 2)

        def _tile_copies(tile_i, slot_):
            start = spin_base + tile_i * tl
            if nl > 1:
                start = pl.multiple_of(start, align)
            col0 = pl.multiple_of(j * nb, 128) if nn > 1 else 0
            cases = []
            for rows, rpred in ((tl + rem, tile_i < nl - 1),
                                (tl_last + rem, tile_i == nl - 1)):
                for cols, cpred in ((nb, j < nn - 1),
                                    (nb_last, j == nn - 1)):
                    cp = pltpu.make_async_copy(
                        yt_ref.at[pl.ds(start, rows), pl.ds(col0, cols)],
                        buf.at[slot_, pl.ds(0, rows), pl.ds(0, cols)],
                        sem.at[slot_])
                    cases.append((jnp.logical_and(rpred, cpred), cp))
            return cases

        @pl.when(i == 0)                    # prime first tile of this block
        def _prime():
            for pred, cp in _tile_copies(i, slot):
                @pl.when(pred)
                def _(cp=cp):
                    cp.start()

        for pred, cp in _tile_copies(i, slot):   # wait for the tile used now
            @pl.when(pred)
            def _(cp=cp):
                cp.wait()

        @pl.when(i + 1 < nl)                # prefetch next tile -> overlaps compute
        def _prefetch():
            for pred, cp in _tile_copies(i + 1, 1 - slot):
                @pl.when(pred)
                def _(cp=cp):
                    cp.start()

        yt = buf[slot][rem:rem + tl].astype(jnp.float32)        # [TL, NB]
    else:
        yt = yt_ref[...].astype(jnp.float32)                    # [TL, NB]

    yp = yp_ref[...].astype(jnp.float32)                        # [TL, NB]

    @pl.when(i == 0)
    def _init():
        for r in accs:
            r[...] = jnp.zeros_like(r)

    finite = jnp.logical_not(jnp.isnan(yt))                     # valid obs
    in_range = None
    if ragged:
        # (TL, 1) row-validity vector; a single broadcast AND per tile.
        row = lax.broadcasted_iota(jnp.int32, (tl, 1), 0) + i * tl
        in_range = row < l_eff
        finite = jnp.logical_and(finite, in_range)

    # ---- single pass per tile: count / sum / sumsq / error (selects, so
    # garbage rows of ragged tiles can never poison the sums) --------------
    finite_f = jnp.where(finite, one, zero)
    yt_clean = jnp.where(finite, yt, zero)
    cnt_t = jnp.sum(finite_f, axis=0, keepdims=True)            # [1, NB]
    sum_t = jnp.sum(yt_clean, axis=0, keepdims=True)
    sumsq_t = jnp.sum(yt_clean * yt_clean, axis=0, keepdims=True)
    d = yp - yt_clean
    num_t = jnp.sum(jnp.where(finite, d * d, zero), axis=0, keepdims=True)

    mean_t = sum_t / jnp.maximum(cnt_t, one)
    m2_t = jnp.maximum(sumsq_t - sum_t * mean_t, zero)

    # ---- Chan parallel merge of (count, mean, M2) across tiles ------------
    n_a = cnt[...]
    mu_a = mean[...]
    n_ab = n_a + cnt_t
    inv = one / jnp.maximum(n_ab, one)
    delta = mean_t - mu_a
    mean[...] = mu_a + delta * (cnt_t * inv)
    m2[...] = m2[...] + m2_t + delta * delta * (n_a * cnt_t * inv)
    cnt[...] = n_ab
    num[...] = num[...] + num_t

    if log_opt:
        # natural log (one fewer full-tile multiply than log10); the common
        # 1/ln(10)^2 factor cancels in the NSE ratio once eps is scaled.
        yt_log = jnp.log(jnp.sqrt(yt) + 0.1)
        dl = jnp.where(finite, jnp.log(jnp.sqrt(yp) + 0.1) - yt_log, zero)
        lnum_t = jnp.sum(dl * dl, axis=0, keepdims=True)

        lmask = jnp.logical_not(jnp.isnan(yt_log))
        if ragged:
            lmask = jnp.logical_and(lmask, in_range)
        lmask_f = jnp.where(lmask, one, zero)
        ytl_clean = jnp.where(lmask, yt_log, zero)
        lcnt_t = jnp.sum(lmask_f, axis=0, keepdims=True)
        lsum_t = jnp.sum(ytl_clean, axis=0, keepdims=True)
        lsumsq_t = jnp.sum(ytl_clean * ytl_clean, axis=0, keepdims=True)
        lmean_t = lsum_t / jnp.maximum(lcnt_t, one)
        lm2_t = jnp.maximum(lsumsq_t - lsum_t * lmean_t, zero)

        ln_a = lcnt[...]
        lmu_a = lmean[...]
        ln_ab = ln_a + lcnt_t
        linv = one / jnp.maximum(ln_ab, one)
        ldelta = lmean_t - lmu_a
        lmean[...] = lmu_a + ldelta * (lcnt_t * linv)
        lm2[...] = lm2[...] + lm2_t + ldelta * ldelta * (ln_a * lcnt_t * linv)
        lcnt[...] = ln_ab
        lnum[...] = lnum[...] + lnum_t

    @pl.when(i == nl - 1)
    def _finalize():
        c = cnt[...]
        l_f = jnp.float32(l_eff)
        # station kept iff (#NaN / L) < 1/5  (replaces torch.index_select)
        valid_out[...] = jnp.where((l_f - c) / l_f < 0.2, one, zero)
        nse_out[...] = 1.0 - num[...] / (m2[...] + eps)
        if log_opt:
            nsel_out[...] = 1.0 - lnum[...] / (lm2[...] + eps_log)


def nse_loss(y_true, y_pred, *, spin_up=0, log_loss_opt=False, w_log=0.25,
             eps=0.01, w_station=None, time_tile=None):
    """Pallas equivalent of nseLoss.forward(yTrue, yPred, spinUp)."""
    L_full, N = y_true.shape
    L = L_full - spin_up
    assert y_pred.shape == (L, N), \
        "yPred must already exclude the spin-up window (as in the original forward)"

    # --- tiling ------------------------------------------------------------
    TL = time_tile if time_tile is not None else _pick_time_tile(L, log_loss_opt)
    TL = min(TL, L)
    if TL < L and TL % 32:
        TL = max(32, TL - TL % 32)
    nL = pl.cdiv(L, TL)
    TL_last = L - (nL - 1) * TL
    ragged = TL_last != TL

    NB = _pick_station_block(N)
    nN = pl.cdiv(N, NB)
    NB_last = N - (nN - 1) * NB

    # --- spin-up handling without any extra HBM pass ------------------------
    manual = spin_up > 0
    itemsize = jnp.dtype(y_true.dtype).itemsize
    align = 8 * max(1, 4 // itemsize)            # sublane packing: f32->8, bf16->16
    rem = spin_up % align
    spin_base = spin_up - rem                    # aligned DMA row offsets

    kernel = functools.partial(
        _nse_kernel, tl=TL, tl_last=TL_last, nb=NB, nb_last=NB_last,
        nl=nL, nn=nN, rem=rem, spin_base=spin_base, align=align, l_eff=L,
        eps=float(eps), eps_log=float(eps) * _LN10_SQ,
        log_opt=bool(log_loss_opt), ragged=ragged, manual=manual)

    n_out = 3 if log_loss_opt else 2
    n_acc = 8 if log_loss_opt else 4
    out_shape = tuple(jax.ShapeDtypeStruct((1, N), jnp.float32)
                      for _ in range(n_out))
    out_specs = [pl.BlockSpec((1, NB), lambda j, i: (0, j))
                 for _ in range(n_out)]

    scratch = [pltpu.VMEM((1, NB), jnp.float32) for _ in range(n_acc)]
    if manual:
        scratch += [pltpu.VMEM((2, TL + align, NB), y_true.dtype),
                    pltpu.SemaphoreType.DMA((2,))]

    if manual:
        yt_spec = pl.BlockSpec(memory_space=pl.ANY)   # raw HBM ref, manual DMA
    else:
        yt_spec = pl.BlockSpec((TL, NB), lambda j, i: (i, j))
    yp_spec = pl.BlockSpec((TL, NB), lambda j, i: (i, j))

    outs = pl.pallas_call(
        kernel,
        out_shape=out_shape,
        grid_spec=pltpu.PrefetchScalarGridSpec(
            num_scalar_prefetch=0,
            grid=(nN, nL),                       # stations parallel, time reduced
            in_specs=[yt_spec, yp_spec],
            out_specs=out_specs,
            scratch_shapes=scratch),
        compiler_params=pltpu.CompilerParams(
            dimension_semantics=("parallel", "arbitrary"),
            vmem_limit_bytes=48 * 1024 * 1024),
    )(y_true, y_pred)                            # native dtype (bf16 ok); upcast in-kernel

    if log_loss_opt:
        nse_t, valid, nse_l_t = outs
    else:
        nse_t, valid = outs

    if w_station is None:
        w = jnp.ones((1, N), dtype=jnp.float32)
    else:
        w = jnp.asarray(w_station, dtype=jnp.float32).reshape(1, N)

    w_eff = w * valid
    w_sum = w_eff.sum()
    nse = (nse_t * w_eff).sum() / w_sum
    if log_loss_opt:
        nse_log = (nse_l_t * w_eff).sum() / w_sum
        nse = nse * (1.0 - w_log) + nse_log * w_log
    return 1.0 - nse


def _nse_loss_ref(y_true, y_pred, *, spin_up=0, log_loss_opt=False, w_log=0.25,
                  eps=0.01, w_station=None):
    """Pure-numpy reference mirroring the PyTorch code (for verification)."""
    y_true = np.asarray(y_true)[spin_up:]
    y_pred = np.asarray(y_pred)
    L, N = y_true.shape
    w = np.ones(N, np.float32) if w_station is None else np.asarray(w_station, np.float32)
    idx = [i for i in range(N) if np.isnan(y_true[:, i]).sum() / L < 1 / 5]
    yt, yp, w = y_true[:, idx], y_pred[:, idx], w[idx]
    mean = np.nanmean(yt, axis=0, keepdims=True)
    mask = np.where(np.isnan(yt), 0.0, 1.0)
    ytp = np.where(np.isnan(yt), 0.0, yt)
    nse_t = 1 - ((yp - ytp) ** 2 * mask).sum(0) / (((ytp - mean) ** 2 * mask).sum(0) + eps)
    nse = (nse_t * w).sum() / w.sum()
    if log_loss_opt:
        ytl = np.log10(np.sqrt(yt) + 0.1)
        ypl = np.log10(np.sqrt(yp) + 0.1)
        lmean = np.nanmean(ytl, axis=0, keepdims=True)
        ytlp = np.where(np.isnan(yt), 0.0, ytl)
        nse_lt = 1 - ((ypl - ytlp) ** 2 * mask).sum(0) / (((ytlp - lmean) ** 2 * mask).sum(0) + eps)
        nse_log = (nse_lt * w).sum() / w.sum()
        nse = nse * (1 - w_log) + nse_log * w_log
    return np.float32(1 - nse)


if __name__ == "__main__":
    key = jax.random.PRNGKey(0)
    k1, k2, k3, k4 = jax.random.split(key, 4)

    # --- case 1: small single-tile problem, both branches (auto path) ------
    L, N = 64, 16
    y_true = jnp.abs(jax.random.normal(k1, (L, N), dtype=jnp.float32)) * 3.0
    y_pred = jnp.abs(jax.random.normal(k2, (L, N), dtype=jnp.float32)) * 3.0
    y_true = y_true.at[3, 1].set(jnp.nan)
    y_true = y_true.at[10, 5].set(jnp.nan)
    y_true = y_true.at[11, 5].set(jnp.nan)
    y_true = y_true.at[0:20, 7].set(jnp.nan)     # 20/64 > 1/5 -> station excluded

    for log_opt in (False, True):
        loss = jax.block_until_ready(nse_loss(y_true, y_pred, log_loss_opt=log_opt))
        ref = _nse_loss_ref(np.array(y_true), np.array(y_pred), log_loss_opt=log_opt)
        np.testing.assert_allclose(np.float32(loss), ref, rtol=2e-4, atol=2e-4)

    # --- case 2: multi time tile + unaligned spin-up (manual DMA path) -----
    L2_full, N2, spin2 = 1200, 16, 37            # spin 37: not a multiple of 8 or TL
    yt2 = jnp.abs(jax.random.normal(k3, (L2_full, N2), dtype=jnp.float32)) * 2.0
    yp2 = jnp.abs(jax.random.normal(k4, (L2_full - spin2, N2), dtype=jnp.float32)) * 2.0
    yt2 = yt2.at[100:360, 3].set(jnp.nan)        # >20% missing -> station excluded
    yt2 = yt2.at[500, 0].set(jnp.nan)
    yt2 = yt2.at[900:910, 9].set(jnp.nan)

    loss2 = jax.block_until_ready(
        nse_loss(yt2, yp2, spin_up=spin2, log_loss_opt=True))
    ref2 = _nse_loss_ref(np.array(yt2), np.array(yp2),
                         spin_up=spin2, log_loss_opt=True)
    np.testing.assert_allclose(np.float32(loss2), ref2, rtol=2e-4, atol=2e-4)

    # --- case 3: multiple (ragged) station blocks + spin-up + weights ------
    L3_full, N3, spin3 = 1061, 200, 24
    k5, k6 = jax.random.split(k4, 2)
    yt3 = jnp.abs(jax.random.normal(k5, (L3_full, N3), dtype=jnp.float32)) * 2.0
    yp3 = jnp.abs(jax.random.normal(k6, (L3_full - spin3, N3), dtype=jnp.float32)) * 2.0
    yt3 = yt3.at[100:360, 3].set(jnp.nan)        # excluded (>20% missing)
    yt3 = yt3.at[40:80, 150].set(jnp.nan)
    yt3 = yt3.at[200:500, 190].set(jnp.nan)      # excluded
    w3 = 0.5 + jnp.arange(N3, dtype=jnp.float32) / N3

    loss3 = jax.block_until_ready(
        nse_loss(yt3, yp3, spin_up=spin3, log_loss_opt=True, w_station=w3))
    ref3 = _nse_loss_ref(np.array(yt3), np.array(yp3), spin_up=spin3,
                         log_loss_opt=True, w_station=np.array(w3))
    np.testing.assert_allclose(np.float32(loss3), ref3, rtol=2e-4, atol=2e-4)

    # --- case 4: bf16 inputs (half the HBM traffic; f32 accumulation) ------
    yt4 = yt2.astype(jnp.bfloat16)
    yp4 = yp2.astype(jnp.bfloat16)
    loss4 = jax.block_until_ready(
        nse_loss(yt4, yp4, spin_up=spin2, log_loss_opt=True))
    ref4 = _nse_loss_ref(np.array(yt4.astype(jnp.float32)),
                         np.array(yp4.astype(jnp.float32)),
                         spin_up=spin2, log_loss_opt=True)
    np.testing.assert_allclose(np.float32(loss4), ref4, rtol=1e-3, atol=1e-3)

    print("KERNEL_OK")
</pallas_src>

<mosaic_0001>
module attributes {stable_mosaic.version = 11 : i64} {
  func.func @_nse_kernel(%arg0: i32, %arg1: i32, %arg2: memref<64x16xf32, #tpu.memory_space<vmem>>, %arg3: memref<64x16xf32, #tpu.memory_space<vmem>>, %arg4: memref<1x16xf32, #tpu.memory_space<vmem>>, %arg5: memref<1x16xf32, #tpu.memory_space<vmem>>, %arg6: memref<1x16xf32, #tpu.memory_space<vmem>>, %arg7: memref<1x16xf32, #tpu.memory_space<vmem>>, %arg8: memref<1x16xf32, #tpu.memory_space<vmem>>, %arg9: memref<1x16xf32, #tpu.memory_space<vmem>>) attributes {dimension_semantics = [#tpu.dimension_semantics<parallel>, #tpu.dimension_semantics<arbitrary>], iteration_bounds = array<i64: 1, 1>, scalar_prefetch = 0 : i64, scratch_operands = 4 : i64, tpu.core_type = #tpu.core_type<tc>, window_params = [{transform_indices = @transform_0, window_bounds = array<i64: 64, 16>}, {transform_indices = @transform_1, window_bounds = array<i64: 64, 16>}, {transform_indices = @transform_2, window_bounds = array<i64: 1, 16>}, {transform_indices = @transform_3, window_bounds = array<i64: 1, 16>}]} {
    %c0 = arith.constant 0 : index
    %c0_0 = arith.constant 0 : index
    %0 = vector.load %arg2[%c0, %c0_0] : memref<64x16xf32, #tpu.memory_space<vmem>>, vector<64x16xf32>
    %c0_1 = arith.constant 0 : index
    %c0_2 = arith.constant 0 : index
    %1 = vector.load %arg3[%c0_1, %c0_2] : memref<64x16xf32, #tpu.memory_space<vmem>>, vector<64x16xf32>
    %c0_i32 = arith.constant 0 : i32
    %2 = arith.cmpi eq, %arg1, %c0_i32 : i32
    %3 = arith.extui %2 : i1 to i32
    %c0_i32_3 = arith.constant 0 : i32
    %4 = arith.cmpi ne, %3, %c0_i32_3 : i32
    scf.if %4 {
      %cst_36 = arith.constant 0.000000e+00 : f32
      %59 = vector.broadcast %cst_36 : f32 to vector<1x16xf32>
      %c0_37 = arith.constant 0 : index
      %c0_38 = arith.constant 0 : index
      %60 = vector.load %arg6[%c0_37, %c0_38] : memref<1x16xf32, #tpu.memory_space<vmem>>, vector<1x16xf32>
      tpu.vector_store %arg6[%c0_37, %c0_38], %59 {strides = array<i32>} : memref<1x16xf32, #tpu.memory_space<vmem>>, vector<1x16xf32>,
      %cst_39 = arith.constant 0.000000e+00 : f32
      %61 = vector.broadcast %cst_39 : f32 to vector<1x16xf32>
      %c0_40 = arith.constant 0 : index
      %c0_41 = arith.constant 0 : index
      %62 = vector.load %arg7[%c0_40, %c0_41] : memref<1x16xf32, #tpu.memory_space<vmem>>, vector<1x16xf32>
      tpu.vector_store %arg7[%c0_40, %c0_41], %61 {strides = array<i32>} : memref<1x16xf32, #tpu.memory_space<vmem>>, vector<1x16xf32>,
      %cst_42 = arith.constant 0.000000e+00 : f32
      %63 = vector.broadcast %cst_42 : f32 to vector<1x16xf32>
      %c0_43 = arith.constant 0 : index
      %c0_44 = arith.constant 0 : index
      %64 = vector.load %arg8[%c0_43, %c0_44] : memref<1x16xf32, #tpu.memory_space<vmem>>, vector<1x16xf32>
      tpu.vector_store %arg8[%c0_43, %c0_44], %63 {strides = array<i32>} : memref<1x16xf32, #tpu.memory_space<vmem>>, vector<1x16xf32>,
      %cst_45 = arith.constant 0.000000e+00 : f32
      %65 = vector.broadcast %cst_45 : f32 to vector<1x16xf32>
      %c0_46 = arith.constant 0 : index
      %c0_47 = arith.constant 0 : index
      %66 = vector.load %arg9[%c0_46, %c0_47] : memref<1x16xf32, #tpu.memory_space<vmem>>, vector<1x16xf32>
      tpu.vector_store %arg9[%c0_46, %c0_47], %65 {strides = array<i32>} : memref<1x16xf32, #tpu.memory_space<vmem>>, vector<1x16xf32>,
    } else {
    }
    %5 = arith.cmpf one, %0, %0 : vector<64x16xf32>
    %cst = arith.constant dense<true> : vector<64x16xi1>
    %6 = arith.xori %5, %cst : vector<64x16xi1>
    %cst_4 = arith.constant 1.000000e+00 : f32
    %cst_5 = arith.constant 0.000000e+00 : f32
    %7 = vector.broadcast %cst_4 : f32 to vector<64x16xf32>
    %8 = vector.broadcast %cst_5 : f32 to vector<64x16xf32>
    %9 = arith.select %6, %7, %8 : vector<64x16xi1>, vector<64x16xf32>
    %cst_6 = arith.constant 0.000000e+00 : f32
    %10 = vector.broadcast %cst_6 : f32 to vector<64x16xf32>
    %11 = arith.select %6, %0, %10 : vector<64x16xi1>, vector<64x16xf32>
    %cst_7 = arith.constant dense<0.000000e+00> : vector<16xf32>
    %12 = vector.multi_reduction <add>, %9, %cst_7 [0] : vector<64x16xf32> to vector<16xf32>
    %13 = vector.shape_cast %12 : vector<16xf32> to vector<1x16xf32>
    %cst_8 = arith.constant dense<0.000000e+00> : vector<16xf32>
    %14 = vector.multi_reduction <add>, %11, %cst_8 [0] : vector<64x16xf32> to vector<16xf32>
    %15 = vector.shape_cast %14 : vector<16xf32> to vector<1x16xf32>
    %16 = arith.mulf %11, %11 : vector<64x16xf32>
    %cst_9 = arith.constant dense<0.000000e+00> : vector<16xf32>
    %17 = vector.multi_reduction <add>, %16, %cst_9 [0] : vector<64x16xf32> to vector<16xf32>
    %18 = vector.shape_cast %17 : vector<16xf32> to vector<1x16xf32>
    %19 = arith.subf %1, %11 : vector<64x16xf32>
    %20 = arith.mulf %19, %19 : vector<64x16xf32>
    %cst_10 = arith.constant 0.000000e+00 : f32
    %21 = vector.broadcast %cst_10 : f32 to vector<64x16xf32>
    %22 = arith.select %6, %20, %21 : vector<64x16xi1>, vector<64x16xf32>
    %cst_11 = arith.constant dense<0.000000e+00> : vector<16xf32>
    %23 = vector.multi_reduction <add>, %22, %cst_11 [0] : vector<64x16xf32> to vector<16xf32>
    %24 = vector.shape_cast %23 : vector<16xf32> to vector<1x16xf32>
    %cst_12 = arith.constant 1.000000e+00 : f32
    %25 = vector.broadcast %cst_12 : f32 to vector<1x16xf32>
    %26 = arith.maximumf %13, %25 : vector<1x16xf32>
    %27 = arith.divf %15, %26 : vector<1x16xf32>
    %28 = arith.mulf %15, %27 : vector<1x16xf32>
    %29 = arith.subf %18, %28 : vector<1x16xf32>
    %cst_13 = arith.constant 0.000000e+00 : f32
    %30 = vector.broadcast %cst_13 : f32 to vector<1x16xf32>
    %31 = arith.maximumf %29, %30 : vector<1x16xf32>
    %c0_14 = arith.constant 0 : index
    %c0_15 = arith.constant 0 : index
    %32 = vector.load %arg6[%c0_14, %c0_15] : memref<1x16xf32, #tpu.memory_space<vmem>>, vector<1x16xf32>
    %c0_16 = arith.constant 0 : index
    %c0_17 = arith.constant 0 : index
    %33 = vector.load %arg7[%c0_16, %c0_17] : memref<1x16xf32, #tpu.memory_space<vmem>>, vector<1x16xf32>
    %34 = arith.addf %32, %13 : vector<1x16xf32>
    %cst_18 = arith.constant 1.000000e+00 : f32
    %35 = vector.broadcast %cst_18 : f32 to vector<1x16xf32>
    %36 = arith.maximumf %34, %35 : vector<1x16xf32>
    %cst_19 = arith.constant 1.000000e+00 : f32
    %37 = vector.broadcast %cst_19 : f32 to vector<1x16xf32>
    %38 = arith.divf %37, %36 : vector<1x16xf32>
    %39 = arith.subf %27, %33 : vector<1x16xf32>
    %40 = arith.mulf %13, %38 : vector<1x16xf32>
    %41 = arith.mulf %39, %40 : vector<1x16xf32>
    %42 = arith.addf %33, %41 : vector<1x16xf32>
    %c0_20 = arith.constant 0 : index
    %c0_21 = arith.constant 0 : index
    %43 = vector.load %arg7[%c0_20, %c0_21] : memref<1x16xf32, #tpu.memory_space<vmem>>, vector<1x16xf32>
    tpu.vector_store %arg7[%c0_20, %c0_21], %42 {strides = array<i32>} : memref<1x16xf32, #tpu.memory_space<vmem>>, vector<1x16xf32>,
    %c0_22 = arith.constant 0 : index
    %c0_23 = arith.constant 0 : index
    %44 = vector.load %arg8[%c0_22, %c0_23] : memref<1x16xf32, #tpu.memory_space<vmem>>, vector<1x16xf32>
    %45 = arith.addf %44, %31 : vector<1x16xf32>
    %46 = arith.mulf %39, %39 : vector<1x16xf32>
    %47 = arith.mulf %32, %13 : vector<1x16xf32>
    %48 = arith.mulf %47, %38 : vector<1x16xf32>
    %49 = arith.mulf %46, %48 : vector<1x16xf32>
    %50 = arith.addf %45, %49 : vector<1x16xf32>
    %c0_24 = arith.constant 0 : index
    %c0_25 = arith.constant 0 : index
    %51 = vector.load %arg8[%c0_24, %c0_25] : memref<1x16xf32, #tpu.memory_space<vmem>>, vector<1x16xf32>
    tpu.vector_store %arg8[%c0_24, %c0_25], %50 {strides = array<i32>} : memref<1x16xf32, #tpu.memory_space<vmem>>, vector<1x16xf32>,
    %c0_26 = arith.constant 0 : index
    %c0_27 = arith.constant 0 : index
    %52 = vector.load %arg6[%c0_26, %c0_27] : memref<1x16xf32, #tpu.memory_space<vmem>>, vector<1x16xf32>
    tpu.vector_store %arg6[%c0_26, %c0_27], %34 {strides = array<i32>} : memref<1x16xf32, #tpu.memory_space<vmem>>, vector<1x16xf32>,
    %c0_28 = arith.constant 0 : index
    %c0_29 = arith.constant 0 : index
    %53 = vector.load %arg9[%c0_28, %c0_29] : memref<1x16xf32, #tpu.memory_space<vmem>>, vector<1x16xf32>
    %54 = arith.addf %53, %24 : vector<1x16xf32>
    %c0_30 = arith.constant 0 : index
    %c0_31 = arith.constant 0 : index
    %55 = vector.load %arg9[%c0_30, %c0_31] : memref<1x16xf32, #tpu.memory_space<vmem>>, vector<1x16xf32>
    tpu.vector_store %arg9[%c0_30, %c0_31], %54 {strides = array<i32>} : memref<1x16xf32, #tpu.memory_space<vmem>>, vector<1x16xf32>,
    %c0_i32_32 = arith.constant 0 : i32
    %56 = arith.cmpi eq, %arg1, %c0_i32_32 : i32
    %57 = arith.extui %56 : i1 to i32
    %cst_33 = arith.constant 1.000000e+00 : f32
    %cst_34 = arith.constant 0.000000e+00 : f32
    %c0_i32_35 = arith.constant 0 : i32
    %58 = arith.cmpi ne, %57, %c0_i32_35 : i32
    scf.if %58 {
      %c0_36 = arith.constant 0 : index
      %c0_37 = arith.constant 0 : index
      %59 = vector.load %arg6[%c0_36, %c0_37] : memref<1x16xf32, #tpu.memory_space<vmem>>, vector<1x16xf32>
      %cst_38 = arith.constant 6.400000e+01 : f32
      %60 = vector.broadcast %cst_38 : f32 to vector<1x16xf32>
      %61 = arith.subf %60, %59 : vector<1x16xf32>
      %cst_39 = arith.constant 6.400000e+01 : f32
      %62 = vector.broadcast %cst_39 : f32 to vector<1x16xf32>
      %63 = arith.divf %61, %62 : vector<1x16xf32>
      %cst_40 = arith.constant 2.000000e-01 : f32
      %64 = vector.broadcast %cst_40 : f32 to vector<1x16xf32>
      %65 = arith.cmpf olt, %63, %64 : vector<1x16xf32>
      %66 = vector.broadcast %cst_33 : f32 to vector<1x16xf32>
      %67 = vector.broadcast %cst_34 : f32 to vector<1x16xf32>
      %68 = arith.select %65, %66, %67 : vector<1x16xi1>, vector<1x16xf32>
      %c0_41 = arith.constant 0 : index
      %c0_42 = arith.constant 0 : index
      %69 = vector.load %arg5[%c0_41, %c0_42] : memref<1x16xf32, #tpu.memory_space<vmem>>, vector<1x16xf32>
      tpu.vector_store %arg5[%c0_41, %c0_42], %68 {strides = array<i32>} : memref<1x16xf32, #tpu.memory_space<vmem>>, vector<1x16xf32>,
      %c0_43 = arith.constant 0 : index
      %c0_44 = arith.constant 0 : index
      %70 = vector.load %arg9[%c0_43, %c0_44] : memref<1x16xf32, #tpu.memory_space<vmem>>, vector<1x16xf32>
      %c0_45 = arith.constant 0 : index
      %c0_46 = arith.constant 0 : index
      %71 = vector.load %arg8[%c0_45, %c0_46] : memref<1x16xf32, #tpu.memory_space<vmem>>, vector<1x16xf32>
      %cst_47 = arith.constant 0.00999999977 : f32
      %72 = vector.broadcast %cst_47 : f32 to vector<1x16xf32>
      %73 = arith.addf %71, %72 : vector<1x16xf32>
      %74 = arith.divf %70, %73 : vector<1x16xf32>
      %cst_48 = arith.constant 1.000000e+00 : f32
      %75 = vector.broadcast %cst_48 : f32 to vector<1x16xf32>
      %76 = arith.subf %75, %74 : vector<1x16xf32>
      %c0_49 = arith.constant 0 : index
      %c0_50 = arith.constant 0 : index
      %77 = vector.load %arg4[%c0_49, %c0_50] : memref<1x16xf32, #tpu.memory_space<vmem>>, vector<1x16xf32>
      tpu.vector_store %arg4[%c0_49, %c0_50], %76 {strides = array<i32>} : memref<1x16xf32, #tpu.memory_space<vmem>>, vector<1x16xf32>,
    } else {
    }
    return
  }
  func.func @transform_0(%arg0: i32, %arg1: i32) -> (i32, i32) {
    %c0_i32 = arith.constant 0 : i32
    return %arg1, %arg0 : i32, i32
  }
  func.func @transform_1(%arg0: i32, %arg1: i32) -> (i32, i32) {
    %c0_i32 = arith.constant 0 : i32
    return %arg1, %arg0 : i32, i32
  }
  func.func @transform_2(%arg0: i32, %arg1: i32) -> (i32, i32) {
    %c0_i32 = arith.constant 0 : i32
    %c0_i32_0 = arith.constant 0 : i32
    return %c0_i32, %arg0 : i32, i32
  }
  func.func @transform_3(%arg0: i32, %arg1: i32) -> (i32, i32) {
    %c0_i32 = arith.constant 0 : i32
    %c0_i32_0 = arith.constant 0 : i32
    return %c0_i32, %arg0 : i32, i32
  }
}

</mosaic_0001>

<llo_original>
// kernel: tpu_custom_call.1
$region0: #{tpu_custom_call.1}
  #allocation0 [shape = 'u32[]', space=smem, size = 0x4, offset = 0x4, fixed_abs, tag = 'smem constant byte address 0x4 - core index']
  #allocation1 [shape = 'u32[72,128]{1,0:T(1,128)}', space=vmem, size = 0x9000, scoped, tag = 'internal scratch']
  #allocation2 [shape = 'f32[1,16]{1,0:T(1,128)}', space=vmem, size = 0x200, scoped, tag = 'scratch operand']
  #allocation3 [shape = 'f32[1,16]{1,0:T(1,128)}', space=vmem, size = 0x200, scoped, tag = 'scratch operand']
  #allocation4 [shape = 'f32[1,16]{1,0:T(1,128)}', space=vmem, size = 0x200, scoped, tag = 'scratch operand']
  #allocation5 [shape = 'f32[1,16]{1,0:T(1,128)}', space=vmem, size = 0x200, scoped, tag = 'scratch operand']
  %s0 = inlined_call_operand.vmem [shape: f32[64,16], index: 0, kind: input, shape index: {}]
  %s1 = inlined_call_operand.vmem [shape: f32[64,16], index: 1, kind: input, shape index: {}]
  %s2 = inlined_call_operand.hbm [shape: f32[1,16], index: 2, kind: output, shape index: {0}]
  %s3 = inlined_call_operand.hbm [shape: f32[1,16], index: 3, kind: output, shape index: {1}]
  %4 = xla_tuple %s2, %s3
  %s5 = sld [smem:[#allocation0]]
  $region34: #{tpu_custom_call.1} parent=0
    _
  %s7 = ssub.s32 1, %s5
  %s8 = scalar_select 0, %s7, %s5
  $region1: #{tpu_custom_call.1} parent=0
    #allocation6 [shape = 'u8[512]{0}', space=vmem, size = 0x400, scoped, tag = 'output window, operand 0, single buffered']
    #allocation7 [shape = 's32[1]{0}', space=sflag, size = 0x4, scoped, tag = 'scoped memory for tpu_custom_call.1']
    #allocation8 [shape = 'u8[512]{0}', space=vmem, size = 0x400, scoped, tag = 'output window, operand 1, single buffered']
    #allocation9 [shape = 's32[1]{0}', space=sflag, size = 0x4, scoped, tag = 'scoped memory for tpu_custom_call.1']
    %9 = vsyncpa [#allocation7], 0
    %10 = vsyncpa [#allocation9], 0
    // Predicated region
    $region2: #{tpu_custom_call.1} parent=1 // pred_check
      _
    $region3: #{tpu_custom_call.1} parent=1 // pred_check_branch
      %12 = sbr.rel (0) target = $region5
    $region4: #{tpu_custom_call.1} parent=1 // pred_region
      _
    $region5: #{tpu_custom_call.1} parent=1 // pred_fallthru
      _
    // Predicated region
    $region6: #{tpu_custom_call.1} parent=1 // pred_check
      _
    $region7: #{tpu_custom_call.1} parent=1 // pred_check_branch
      %14 = sbr.rel (0) target = $region9
    $region8: #{tpu_custom_call.1} parent=1 // pred_region
      _
    $region9: #{tpu_custom_call.1} parent=1 // pred_fallthru
      _
    %v15 = vld [vmem:[%s0] sm:$0xff]
    %v16 = vld [vmem:[%s0 + $0x8] sm:$0xff]
    %v17 = vld [vmem:[%s0 + $0x10] sm:$0xff]
    %v18 = vld [vmem:[%s0 + $0x18] sm:$0xff]
    %v19 = vld [vmem:[%s0 + $0x20] sm:$0xff]
    %v20 = vld [vmem:[%s0 + $0x28] sm:$0xff]
    %v21 = vld [vmem:[%s0 + $0x30] sm:$0xff]
    %v22 = vld [vmem:[%s0 + $0x38] sm:$0xff]
    %v23 = vld [vmem:[%s1] sm:$0xff]
    %v24 = vld [vmem:[%s1 + $0x8] sm:$0xff]
    %v25 = vld [vmem:[%s1 + $0x10] sm:$0xff]
    %v26 = vld [vmem:[%s1 + $0x18] sm:$0xff]
    %v27 = vld [vmem:[%s1 + $0x20] sm:$0xff]
    %v28 = vld [vmem:[%s1 + $0x28] sm:$0xff]
    %v29 = vld [vmem:[%s1 + $0x30] sm:$0xff]
    %v30 = vld [vmem:[%s1 + $0x38] sm:$0xff]
    %p31 = scmp.eq.s32.totalorder 0, 0
    // Predicated region
    $region10: #{tpu_custom_call.1} parent=1 // pred_check
      %p32 = pneg %p31
    $region11: #{tpu_custom_call.1} parent=1 // pred_check_branch
      %34 = sbr.rel (%p32) target = $region13
    $region12: #{tpu_custom_call.1} parent=1 // pred_region
      %vm35 = vcmask 122880
      %36 = vst.msk [vmem:[#allocation2] sm:$0x1] %vm35, 0.0
      %37 = vst.msk [vmem:[#allocation3] sm:$0x1] %vm35, 0.0
      %38 = vst.msk [vmem:[#allocation4] sm:$0x1] %vm35, 0.0
      %39 = vst.msk [vmem:[#allocation5] sm:$0x1] %vm35, 0.0
    $region13: #{tpu_custom_call.1} parent=1 // pred_fallthru
      _
    %vm40 = vcmp.ne.f32.partialorder %v15, %v15
    %vm41 = vcmp.ne.f32.partialorder %v16, %v16
    %vm42 = vcmp.ne.f32.partialorder %v17, %v17
    %vm43 = vcmp.ne.f32.partialorder %v18, %v18
    %vm44 = vcmp.ne.f32.partialorder %v19, %v19
    %vm45 = vcmp.ne.f32.partialorder %v20, %v20
    %vm46 = vcmp.ne.f32.partialorder %v21, %v21
    %vm47 = vcmp.ne.f32.partialorder %v22, %v22
    %vm48 = vmxor %vm40, 1
    %vm49 = vmxor %vm41, 1
    %vm50 = vmxor %vm42, 1
    %vm51 = vmxor %vm43, 1
    %vm52 = vmxor %vm44, 1
    %vm53 = vmxor %vm45, 1
    %vm54 = vmxor %vm46, 1
    %vm55 = vmxor %vm47, 1
    %v56 = vsel %vm48, 1.0, 0.0
    %v57 = vsel %vm49, 1.0, 0.0
    %v58 = vsel %vm50, 1.0, 0.0
    %v59 = vsel %vm51, 1.0, 0.0
    %v60 = vsel %vm52, 1.0, 0.0
    %v61 = vsel %vm53, 1.0, 0.0
    %v62 = vsel %vm54, 1.0, 0.0
    %v63 = vsel %vm55, 1.0, 0.0
    %v64 = vsel %vm48, %v15, 0.0
    %v65 = vsel %vm49, %v16, 0.0
    %v66 = vsel %vm50, %v17, 0.0
    %v67 = vsel %vm51, %v18, 0.0
    %v68 = vsel %vm52, %v19, 0.0
    %v69 = vsel %vm53, %v20, 0.0
    %v70 = vsel %vm54, %v21, 0.0
    %v71 = vsel %vm55, %v22, 0.0
    %vm72 = vcmask 130048
    %v73 = vsel %vm72, %v56, 0.0
    %v74 = vsel %vm72, %v57, 0.0
    %v75 = vadd.f32 %v73, %v74
    %v76 = vsel %vm72, %v58, 0.0
    %v77 = vadd.f32 %v75, %v76
    %v78 = vsel %vm72, %v59, 0.0
    %v79 = vadd.f32 %v77, %v78
    %v80 = vsel %vm72, %v60, 0.0
    %v81 = vadd.f32 %v79, %v80
    %v82 = vsel %vm72, %v61, 0.0
    %v83 = vadd.f32 %v81, %v82
    %v84 = vsel %vm72, %v62, 0.0
    %v85 = vadd.f32 %v83, %v84
    %v86 = vsel %vm72, %v63, 0.0
    %v87 = vadd.f32 %v85, %v86
    %v88 = vrot.slane %v87, 4
    %v89 = vadd.f32 %v87, %v88
    %v90 = vrot.slane %v89, 2
    %v91 = vadd.f32 %v89, %v90
    %v92 = vrot.slane %v91, 1
    %v93 = vadd.f32 %v91, %v92
    %v94 = vsel %vm72, %v64, 0.0
    %v95 = vsel %vm72, %v65, 0.0
    %v96 = vadd.f32 %v94, %v95
    %v97 = vsel %vm72, %v66, 0.0
    %v98 = vadd.f32 %v96, %v97
    %v99 = vsel %vm72, %v67, 0.0
    %v100 = vadd.f32 %v98, %v99
    %v101 = vsel %vm72, %v68, 0.0
    %v102 = vadd.f32 %v100, %v101
    %v103 = vsel %vm72, %v69, 0.0
    %v104 = vadd.f32 %v102, %v103
    %v105 = vsel %vm72, %v70, 0.0
    %v106 = vadd.f32 %v104, %v105
    %v107 = vsel %vm72, %v71, 0.0
    %v108 = vadd.f32 %v106, %v107
    %v109 = vrot.slane %v108, 4
    %v110 = vadd.f32 %v108, %v109
    %v111 = vrot.slane %v110, 2
    %v112 = vadd.f32 %v110, %v111
    %v113 = vrot.slane %v112, 1
    %v114 = vadd.f32 %v112, %v113
    %v115 = vmul.f32 %v64, %v64
    %v116 = vmul.f32 %v65, %v65
    %v117 = vmul.f32 %v66, %v66
    %v118 = vmul.f32 %v67, %v67
    %v119 = vmul.f32 %v68, %v68
    %v120 = vmul.f32 %v69, %v69
    %v121 = vmul.f32 %v70, %v70
    %v122 = vmul.f32 %v71, %v71
    %v123 = vsel %vm72, %v115, 0.0
    %v124 = vsel %vm72, %v116, 0.0
    %v125 = vadd.f32 %v123, %v124
    %v126 = vsel %vm72, %v117, 0.0
    %v127 = vadd.f32 %v125, %v126
    %v128 = vsel %vm72, %v118, 0.0
    %v129 = vadd.f32 %v127, %v128
    %v130 = vsel %vm72, %v119, 0.0
    %v131 = vadd.f32 %v129, %v130
    %v132 = vsel %vm72, %v120, 0.0
    %v133 = vadd.f32 %v131, %v132
    %v134 = vsel %vm72, %v121, 0.0
    %v135 = vadd.f32 %v133, %v134
    %v136 = vsel %vm72, %v122, 0.0
    %v137 = vadd.f32 %v135, %v136
    %v138 = vrot.slane %v137, 4
    %v139 = vadd.f32 %v137, %v138
    %v140 = vrot.slane %v139, 2
    %v141 = vadd.f32 %v139, %v140
    %v142 = vrot.slane %v141, 1
    %v143 = vadd.f32 %v141, %v142
    %v144 = vsub.f32 %v23, %v64
    %v145 = vsub.f32 %v24, %v65
    %v146 = vsub.f32 %v25, %v66
    %v147 = vsub.f32 %v26, %v67
    %v148 = vsub.f32 %v27, %v68
    %v149 = vsub.f32 %v28, %v69
    %v150 = vsub.f32 %v29, %v70
    %v151 = vsub.f32 %v30, %v71
    %v152 = vmul.f32 %v144, %v144
    %v153 = vmul.f32 %v145, %v145
    %v154 = vmul.f32 %v146, %v146
    %v155 = vmul.f32 %v147, %v147
    %v156 = vmul.f32 %v148, %v148
    %v157 = vmul.f32 %v149, %v149
    %v158 = vmul.f32 %v150, %v150
    %v159 = vmul.f32 %v151, %v151
    %v160 = vsel %vm48, %v152, 0.0
    %v161 = vsel %vm49, %v153, 0.0
    %v162 = vsel %vm50, %v154, 0.0
    %v163 = vsel %vm51, %v155, 0.0
    %v164 = vsel %vm52, %v156, 0.0
    %v165 = vsel %vm53, %v157, 0.0
    %v166 = vsel %vm54, %v158, 0.0
    %v167 = vsel %vm55, %v159, 0.0
    %v168 = vsel %vm72, %v160, 0.0
    %v169 = vsel %vm72, %v161, 0.0
    %v170 = vadd.f32 %v168, %v169
    %v171 = vsel %vm72, %v162, 0.0
    %v172 = vadd.f32 %v170, %v171
    %v173 = vsel %vm72, %v163, 0.0
    %v174 = vadd.f32 %v172, %v173
    %v175 = vsel %vm72, %v164, 0.0
    %v176 = vadd.f32 %v174, %v175
    %v177 = vsel %vm72, %v165, 0.0
    %v178 = vadd.f32 %v176, %v177
    %v179 = vsel %vm72, %v166, 0.0
    %v180 = vadd.f32 %v178, %v179
    %v181 = vsel %vm72, %v167, 0.0
    %v182 = vadd.f32 %v180, %v181
    %v183 = vrot.slane %v182, 4
    %v184 = vadd.f32 %v182, %v183
    %v185 = vrot.slane %v184, 2
    %v186 = vadd.f32 %v184, %v185
    %v187 = vrot.slane %v186, 1
    %v188 = vadd.f32 %v186, %v187
    %v189 = vmax.f32 %v93, 1.0
    %v190 = vrcp.pop %v189
    %v191 = vmul.f32 %v189, %v190
    %v192 = vsub.f32 1.0, %v191
    %v193 = vmul.f32 %v190, %v192
    %v194 = vadd.f32 %v190, %v193
    %vm195 = vweird.f32 %v189
    %vm196 = vweird.f32 %v190
    %vm197 = vmor %vm195, %vm196
    %v198 = vsel %vm197, %v190, %v194
    %v199 = vand.u32 2147483647, %v189
    %vm200 = vcmp.eq.f32.partialorder %v199, 8.507059e+37
    %v201 = vand.u32 %v189, 2147483648
    %v202 = vor.u32 1.1754944e-38, %v201
    %v203 = vsel %vm200, %v202, %v198
    %v204 = vmul.f32 %v114, %v203
    %v205 = vmul.f32 %v114, %v204
    %v206 = vsub.f32 %v143, %v205
    %v207 = vmax.f32 %v206, 0.0
    %v208 = vld [vmem:[#allocation2] sm:$0x1]
    %v209 = vld [vmem:[#allocation3] sm:$0x1]
    %v210 = vadd.f32 %v208, %v93
    %v211 = vmax.f32 %v210, 1.0
    %v212 = vrcp.pop %v211
    %v213 = vmul.f32 %v211, %v212
    %v214 = vsub.f32 1.0, %v213
    %v215 = vmul.f32 %v212, %v214
    %v216 = vadd.f32 %v212, %v215
    %vm217 = vweird.f32 %v211
    %vm218 = vweird.f32 %v212
    %vm219 = vmor %vm217, %vm218
    %v220 = vsel %vm219, %v212, %v216
    %v221 = vand.u32 2147483647, %v211
    %vm222 = vcmp.eq.f32.partialorder %v221, 8.507059e+37
    %v223 = vand.u32 %v211, 2147483648
    %v224 = vor.u32 1.1754944e-38, %v223
    %v225 = vsel %vm222, %v224, %v220
    %v226 = vmul.f32 1.0, %v225
    %v227 = vsub.f32 %v204, %v209
    %v228 = vmul.f32 %v93, %v226
    %v229 = vmul.f32 %v227, %v228
    %v230 = vadd.f32 %v209, %v229
    %vm231 = vcmask 122880
    %232 = vst.msk [vmem:[#allocation3] sm:$0x1] %vm231, %v230
    %v233 = vld [vmem:[#allocation4] sm:$0x1]
    %v234 = vadd.f32 %v233, %v207
    %v235 = vmul.f32 %v227, %v227
    %v236 = vmul.f32 %v208, %v93
    %v237 = vmul.f32 %v236, %v226
    %v238 = vmul.f32 %v235, %v237
    %v239 = vadd.f32 %v234, %v238
    %240 = vst.msk [vmem:[#allocation4] sm:$0x1] %vm231, %v239
    %241 = vst.msk [vmem:[#allocation2] sm:$0x1] %vm231, %v210
    %v242 = vld [vmem:[#allocation5] sm:$0x1]
    %v243 = vadd.f32 %v242, %v188
    %244 = vst.msk [vmem:[#allocation5] sm:$0x1] %vm231, %v243
    // Predicated region
    $region14: #{tpu_custom_call.1} parent=1 // pred_check
      %p245 = pneg %p31
    $region15: #{tpu_custom_call.1} parent=1 // pred_check_branch
      %247 = sbr.rel (%p245) target = $region17
    $region16: #{tpu_custom_call.1} parent=1 // pred_region
      %v248 = vld [vmem:[#allocation2] sm:$0x1]
      %v249 = vsub.f32 64.0, %v248
      %v250 = vrcp.pop 64.0
      %v251 = vmul.f32 64.0, %v250
      %v252 = vsub.f32 1.0, %v251
      %v253 = vmul.f32 %v250, %v252
      %v254 = vadd.f32 %v250, %v253
      %vm255 = vweird.f32 %v250
      %v256 = vsel %vm255, %v250, %v254
      %v257 = vmul.f32 %v249, %v256
      %vm258 = vcmp.lt.f32.partialorder %v257, 0.2
      %v259 = vsel %vm258, 1.0, 0.0
      %260 = vst.msk [vmem:[#allocation8] sm:$0x1] %vm231, %v259
      %v261 = vld [vmem:[#allocation5] sm:$0x1]
      %v262 = vld [vmem:[#allocation4] sm:$0x1]
      %v263 = vadd.f32 %v262, 0.01
      %v264 = vrcp.pop %v263
      %v265 = vmul.f32 %v263, %v264
      %v266 = vsub.f32 1.0, %v265
      %v267 = vmul.f32 %v264, %v266
      %v268 = vadd.f32 %v264, %v267
      %vm269 = vweird.f32 %v263
      %vm270 = vweird.f32 %v264
      %vm271 = vmor %vm269, %vm270
      %v272 = vsel %vm271, %v264, %v268
      %v273 = vand.u32 2147483647, %v263
      %vm274 = vcmp.eq.f32.partialorder %v273, 8.507059e+37
      %v275 = vand.u32 %v263, 2147483648
      %v276 = vor.u32 1.1754944e-38, %v275
      %v277 = vsel %vm274, %v276, %v272
      %v278 = vmul.f32 %v261, %v277
      %v279 = vsub.f32 1.0, %v278
      %280 = vst.msk [vmem:[#allocation6] sm:$0x1] %vm231, %v279
    $region17: #{tpu_custom_call.1} parent=1 // pred_fallthru
      _
    // Predicated region
    $region18: #{tpu_custom_call.1} parent=1 // pred_check
      _
    $region19: #{tpu_custom_call.1} parent=1 // pred_check_branch
      %282 = sbr.rel (0) target = $region21
    $region20: #{tpu_custom_call.1} parent=1 // pred_region
      %284 = vsyncadd [#allocation7], 0
      %s286 = sshll.u32 [#allocation6], 4
      %s287 = int_to_ptr.vmem [resolvable:$true] %s286
      %s288 = sshll.u32 %s2, 4
      %s289 = int_to_ptr.hbm [resolvable:$true] %s288
      %291 = dma.vmem_to_hbm [thread:$0]  %s287, 16, %s289, [#allocation7]
    $region21: #{tpu_custom_call.1} parent=1 // pred_fallthru
      _
    // Predicated region
    $region22: #{tpu_custom_call.1} parent=1 // pred_check
      _
    $region23: #{tpu_custom_call.1} parent=1 // pred_check_branch
      %293 = sbr.rel (0) target = $region25
    $region24: #{tpu_custom_call.1} parent=1 // pred_region
      %295 = vsyncadd [#allocation9], 0
      %s297 = sshll.u32 [#allocation8], 4
      %s298 = int_to_ptr.vmem [resolvable:$true] %s297
      %s299 = sshll.u32 %s3, 4
      %s300 = int_to_ptr.hbm [resolvable:$true] %s299
      %302 = dma.vmem_to_hbm [thread:$0]  %s298, 16, %s300, [#allocation9]
    $region25: #{tpu_custom_call.1} parent=1 // pred_fallthru
      _
    // Predicated region
    $region26: #{tpu_custom_call.1} parent=1 // pred_check
      _
    $region27: #{tpu_custom_call.1} parent=1 // pred_check_branch
      %304 = sbr.rel (0) target = $region29
    $region28: #{tpu_custom_call.1} parent=1 // pred_region
      %306 = dma.done [#allocation7], 16
    $region29: #{tpu_custom_call.1} parent=1 // pred_fallthru
      _
    // Predicated region
    $region30: #{tpu_custom_call.1} parent=1 // pred_check
      _
    $region31: #{tpu_custom_call.1} parent=1 // pred_check_branch
      %308 = sbr.rel (0) target = $region33
    $region32: #{tpu_custom_call.1} parent=1 // pred_region
      %310 = dma.done [#allocation9], 16
    $region33: #{tpu_custom_call.1} parent=1 // pred_fallthru
      _
    %311 = vsyncpa [#allocation7], 1
    %312 = vsyncpa [#allocation9], 1

</llo_original>
